<compile_context>
chip_gen: v7x
topology: tpu7x:2x2x1
jax: 0.10.0
libtpu: 0.0.40
codegen_flags: <defaults>
</compile_context>

<pallas_src>
import math
from functools import partial

import jax
import jax.numpy as jnp
from jax.experimental import pallas as pl
from jax.experimental.pallas import tpu as pltpu

LANES = 128
SUBLANES = 8
# Total VMEM budget for the ~6 resident tiles of the gridded path
# (x, pe, out, each double-buffered).  12 MiB fits v5e's 16 MiB scoped default
# and leaves headroom under v7x's 64 MiB physical VMEM.
_VMEM_TILE_BUDGET = 12 * 1024 * 1024
# Problems smaller than this run as a single no-grid invocation (everything
# resident in VMEM) with batch collapsed into the sublane axis.
_SINGLE_STEP_BYTES = 2 * 1024 * 1024
# Explicit scoped-VMEM limit (v5e's default is only 16 MiB; 32 MiB is safe on
# all generations, <= v7x's 64 MiB physical VMEM).
_VMEM_LIMIT = 32 * 1024 * 1024


def _round_up(x, m):
    return (x + m - 1) // m * m


# --------------------------------------------------------------------------- #
# Kernels
# --------------------------------------------------------------------------- #
def _add_pe_kernel(x_ref, pe_ref, o_ref):
    """Elementwise x + pe on identically-shaped (rows, lanes) tiles (VPU only)."""
    o_ref[...] = (x_ref[...].astype(jnp.float32)
                  + pe_ref[...].astype(jnp.float32)).astype(o_ref.dtype)


def _add_pe_bcast_kernel(batch, x_ref, pe_ref, o_ref):
    """Tiny-shape kernel.  x: (batch*rows, lanes), pe: (rows, lanes).

    Batch is collapsed into the sublane axis; the small pe tile is broadcast
    over batch *in VMEM* (sublane-dim concat == jnp.tile(pe, (batch, 1))), so
    the store is one dense lane/sublane slab instead of `batch` padded
    (rows, 128) tiles.
    """
    pe = pe_ref[...].astype(jnp.float32)
    if batch > 1:
        pe = jnp.concatenate([pe] * batch, axis=0)
    o_ref[...] = (x_ref[...].astype(jnp.float32) + pe).astype(o_ref.dtype)


# --------------------------------------------------------------------------- #
# pallas_call wrappers
# --------------------------------------------------------------------------- #
def _pick_block_rows(n_lanes, itemsize):
    """Largest power-of-two row block (<=1024) whose 6 resident tiles fit budget."""
    rows = 1024
    while rows > SUBLANES and 6 * rows * n_lanes * itemsize > _VMEM_TILE_BUDGET:
        rows //= 2
    return max(rows, SUBLANES)


def _gridded_add(x_v, pe_v, block_rows, out_dtype, in_place):
    """x_v: (B, R, C), pe_v: (>=R, C) -> out[b, r, c] = x[b, r, c] + pe[r, c]."""
    B, R, C = x_v.shape
    cost = pl.CostEstimate(
        flops=B * R * C,
        transcendentals=0,
        bytes_accessed=B * R * C * (x_v.dtype.itemsize + out_dtype.itemsize)
        + R * C * pe_v.dtype.itemsize,
    )
    alias = {0: 0} if (in_place and x_v.dtype == out_dtype) else {}
    return pl.pallas_call(
        _add_pe_kernel,
        out_shape=jax.ShapeDtypeStruct((B, R, C), out_dtype),
        # Batch is the inner grid axis: the pe block index does not change
        # across it, so the table block is fetched once per row block.
        grid=(pl.cdiv(R, block_rows), B),
        in_specs=[
            # x: one batch element per grid step (squeezed), lane-dense last dim.
            pl.BlockSpec((None, block_rows, C), lambda r, b: (b, r, 0)),
            # pe: same row window, batch-independent -> the BlockSpec performs
            # the pe[:S] selection (no wrapper-side slice / extra HBM copy).
            pl.BlockSpec((block_rows, C), lambda r, b: (r, 0)),
        ],
        out_specs=pl.BlockSpec((None, block_rows, C), lambda r, b: (b, r, 0)),
        input_output_aliases=alias,
        cost_estimate=cost,
        compiler_params=pltpu.CompilerParams(
            # Both axes independent: megacore / v7x dual-TC can split the stream.
            dimension_semantics=("parallel", "parallel"),
            vmem_limit_bytes=_VMEM_LIMIT,
        ),
    )(x_v, pe_v)


def _single_step_add(x_v, pe_v, batch, out_dtype, in_place):
    """Tiny problems: one invocation, whole arrays resident in VMEM."""
    BR, C = x_v.shape
    R = pe_v.shape[0]
    cost = pl.CostEstimate(
        flops=BR * C,
        transcendentals=0,
        bytes_accessed=BR * C * (x_v.dtype.itemsize + out_dtype.itemsize)
        + R * C * pe_v.dtype.itemsize,
    )
    alias = {0: 0} if (in_place and x_v.dtype == out_dtype) else {}
    return pl.pallas_call(
        partial(_add_pe_bcast_kernel, batch),
        out_shape=jax.ShapeDtypeStruct((BR, C), out_dtype),
        in_specs=[
            pl.BlockSpec(memory_space=pltpu.MemorySpace.VMEM),
            pl.BlockSpec(memory_space=pltpu.MemorySpace.VMEM),
        ],
        out_specs=pl.BlockSpec(memory_space=pltpu.MemorySpace.VMEM),
        input_output_aliases=alias,
        cost_estimate=cost,
        compiler_params=pltpu.CompilerParams(vmem_limit_bytes=_VMEM_LIMIT),
    )(x_v, pe_v)


# --------------------------------------------------------------------------- #
# PE table (mirrors the PyTorch __init__)
# --------------------------------------------------------------------------- #
def make_pe_table(d_model, max_len=5000, dtype=jnp.float32):
    """Sinusoidal positional-encoding table, identical to the PyTorch buffer."""
    position = jnp.arange(max_len, dtype=jnp.float32)[:, None]              # (L, 1)
    div_term = jnp.exp(jnp.arange(0, d_model, 2, dtype=jnp.float32)
                       * (-math.log(10000.0) / d_model))                    # (ceil(D/2),)
    angles = position * div_term                                            # (L, ceil(D/2))
    pe = jnp.zeros((max_len, d_model), jnp.float32)
    pe = pe.at[:, 0::2].set(jnp.sin(angles))
    pe = pe.at[:, 1::2].set(jnp.cos(angles[:, : d_model // 2]))             # odd-D safe
    return pe.astype(dtype)                                                 # (L, D)


# --------------------------------------------------------------------------- #
# Forward
# --------------------------------------------------------------------------- #
def _positional_encoding_impl(x, pe_table, *, in_place=False):
    """x: (B, S, D) -> x + pe_table[:S], broadcast over batch."""
    B, S, D = x.shape
    max_len, d_model = pe_table.shape
    if d_model != D:
        raise ValueError(f"d_model mismatch: x has {D}, pe_table has {d_model}")
    if S > max_len:
        raise ValueError(f"sequence length {S} exceeds max_len {max_len}")

    # Match torch promotion (bf16 x + f32 buffer -> f32); f32 stays f32.
    out_dtype = jnp.result_type(x.dtype, pe_table.dtype)
    itemsize = max(x.dtype.itemsize, out_dtype.itemsize)

    if D % LANES == 0:
        # ---- Lane-aligned path: native layout, zero wrapper-side ops -------
        if S >= SUBLANES:
            # Row block must be a multiple of 8 so the pe BlockSpec (a window
            # into the full (max_len, D) table) satisfies the (8, 128) rule.
            block_rows = min(_pick_block_rows(D, itemsize),
                             (S // SUBLANES) * SUBLANES)
            return _gridded_add(x, pe_table, block_rows, out_dtype, in_place)
        # Tiny-S corner: slice so both row extents equal the full array dims.
        return _gridded_add(x, pe_table[:S], S, out_dtype, in_place)

    # ---- Fallback: D not a multiple of 128 -> lane-dense flattened view ----
    # (The flatten/pad of pe cannot be expressed by a BlockSpec, so it is done
    # once in the wrapper; output stores stay unmasked 128-lane slabs.)
    n = S * D
    p = _round_up(n, LANES)
    rows = p // LANES
    x_flat = x.reshape(B, n)
    pe_flat = pe_table[:S].reshape(n)
    if p != n:
        x_flat = jnp.pad(x_flat, ((0, 0), (0, p - n)))
        pe_flat = jnp.pad(pe_flat, (0, p - n))
    pe_v = pe_flat.reshape(rows, LANES)

    small = (2 * B + 1) * rows * LANES * itemsize <= _SINGLE_STEP_BYTES
    if small and B <= 8:
        # Collapse batch into the sublane axis -> dense stores, single step.
        out = _single_step_add(x_flat.reshape(B * rows, LANES), pe_v, B,
                               out_dtype, in_place)
    else:
        x_v = x_flat.reshape(B, rows, LANES)
        if rows <= SUBLANES:
            block_rows = rows
        else:
            block_rows = min(_pick_block_rows(LANES, itemsize),
                             (rows // SUBLANES) * SUBLANES)
        out = _gridded_add(x_v, pe_v, block_rows, out_dtype, in_place)

    out = out.reshape(B, p)
    if p != n:
        out = out[:, :n]
    return out.reshape(B, S, D)


# Default entry point (out-of-place, x is not donated).
positional_encoding = jax.jit(partial(_positional_encoding_impl, in_place=False))

# In-place variant (review item): output aliases x's HBM buffer
# (input_output_aliases={0: 0}) and x is donated at the jit boundary,
# avoiding an extra HBM allocation around the call.
positional_encoding_inplace = jax.jit(
    partial(_positional_encoding_impl, in_place=True), donate_argnums=(0,))


def reference(x, pe_table):
    """Pure-JAX reference of the PyTorch forward."""
    out_dtype = jnp.result_type(x.dtype, pe_table.dtype)
    return (x.astype(jnp.float32)
            + pe_table[None, :x.shape[1], :].astype(jnp.float32)).astype(out_dtype)


if __name__ == "__main__":
    key = jax.random.PRNGKey(0)
    k0, k1, k2, k3 = jax.random.split(key, 4)

    # 1) Module-consistent toy shape (B=2, S=8, d_model=32):
    #    lane-dense fallback path, batch collapsed into the sublane axis.
    B, S, D = 2, 8, 32
    pe32 = make_pe_table(D, max_len=64)
    x = jax.random.normal(k0, (B, S, D), jnp.float32)
    out = jax.block_until_ready(positional_encoding(x, pe32))
    assert out.shape == (B, S, D) and out.dtype == x.dtype
    assert jnp.allclose(out, reference(x, pe32), atol=1e-6, rtol=1e-6)

    # 2) Lane-aligned d_model: gridded streaming path, pe windowed purely by
    #    the BlockSpec (no wrapper-side slice of the table).
    pe128 = make_pe_table(128, max_len=64)
    x2 = jax.random.normal(k1, (2, 16, 128), jnp.float32)
    out2 = jax.block_until_ready(positional_encoding(x2, pe128))
    assert jnp.allclose(out2, reference(x2, pe128), atol=1e-6, rtol=1e-6)

    # 3) S*D not a multiple of 128: padded lane-dense fallback.
    pe24 = make_pe_table(24, max_len=64)
    x3 = jax.random.normal(k2, (2, 5, 24), jnp.float32)
    out3 = jax.block_until_ready(positional_encoding(x3, pe24))
    assert jnp.allclose(out3, reference(x3, pe24), atol=1e-6, rtol=1e-6)

    # 4) In-place variant: output aliases the (donated) x buffer.
    x4 = jax.random.normal(k3, (2, 16, 128), jnp.float32)
    expected4 = reference(x4, pe128)
    out4 = jax.block_until_ready(positional_encoding_inplace(x4, pe128))
    assert jnp.allclose(out4, expected4, atol=1e-6, rtol=1e-6)

    print("KERNEL_OK")
</pallas_src>

<mosaic_0001>
module attributes {stable_mosaic.version = 11 : i64} {
  func.func @_add_pe_bcast_kernel(%arg0: memref<4x128xf32, #tpu.memory_space<vmem>>, %arg1: memref<2x128xf32, #tpu.memory_space<vmem>>, %arg2: memref<4x128xf32, #tpu.memory_space<vmem>>) attributes {dimension_semantics = [], scalar_prefetch = 0 : i64, scratch_operands = 0 : i64, tpu.core_type = #tpu.core_type<tc>} {
    %c0 = arith.constant 0 : index
    %c0_0 = arith.constant 0 : index
    %0 = vector.load %arg1[%c0, %c0_0] : memref<2x128xf32, #tpu.memory_space<vmem>>, vector<2x128xf32>
    %1 = tpu.concatenate %0, %0 in 0 : vector<2x128xf32>, vector<2x128xf32> -> vector<4x128xf32>
    %c0_1 = arith.constant 0 : index
    %c0_2 = arith.constant 0 : index
    %2 = vector.load %arg0[%c0_1, %c0_2] : memref<4x128xf32, #tpu.memory_space<vmem>>, vector<4x128xf32>
    %3 = arith.addf %2, %1 : vector<4x128xf32>
    %c0_3 = arith.constant 0 : index
    %c0_4 = arith.constant 0 : index
    %4 = vector.load %arg2[%c0_3, %c0_4] : memref<4x128xf32, #tpu.memory_space<vmem>>, vector<4x128xf32>
    tpu.vector_store %arg2[%c0_3, %c0_4], %3 {strides = array<i32>} : memref<4x128xf32, #tpu.memory_space<vmem>>, vector<4x128xf32>,
    return
  }
}

</mosaic_0001>

<llo_original>
// kernel: _positional_encoding_impl.1
$region0: #{_positional_encoding_impl.1}
  #allocation0 [shape = 'u32[]', space=smem, size = 0x4, offset = 0x4, fixed_abs, tag = 'smem constant byte address 0x4 - core index']
  #allocation1 [shape = 'u32[144,128]{1,0:T(1,128)}', space=vmem, size = 0x12000, scoped, tag = 'internal scratch']
  %s0 = inlined_call_operand.vmem [shape: f32[4,128], index: 0, kind: input, shape index: {}]
  %s1 = inlined_call_operand.vmem [shape: f32[2,128], index: 1, kind: input, shape index: {}]
  %s2 = inlined_call_operand.vmem [shape: f32[4,128], index: 2, kind: output, shape index: {}]
  %s3 = sld [smem:[#allocation0]]
  $region18: #{_positional_encoding_impl.1} parent=0
    _
  %s5 = ssub.s32 1, %s3
  %s6 = scalar_select 0, %s5, %s3
  // Predicated region
  $region2: #{_positional_encoding_impl.1} parent=0 // pred_check
    _
  $region3: #{_positional_encoding_impl.1} parent=0 // pred_check_branch
    %8 = sbr.rel (0) target = $region5
  $region4: #{_positional_encoding_impl.1} parent=0 // pred_region
    _
  $region5: #{_positional_encoding_impl.1} parent=0 // pred_fallthru
    _
  // Predicated region
  $region6: #{_positional_encoding_impl.1} parent=0 // pred_check
    _
  $region7: #{_positional_encoding_impl.1} parent=0 // pred_check_branch
    %10 = sbr.rel (0) target = $region9
  $region8: #{_positional_encoding_impl.1} parent=0 // pred_region
    _
  $region9: #{_positional_encoding_impl.1} parent=0 // pred_fallthru
    _
  %v11 = vld [vmem:[%s1] sm:$0x3]
  %v13 = vrot.slane %v11, 6
  %vm15 = vcmask 1041408
  %v16 = vsel %vm15, %v11, %v13
  %v17 = vld [vmem:[%s0] sm:$0xf]
  %v18 = vadd.f32 %v17, %v16
  %19 = vst [vmem:[%s2] sm:$0xf] %v18
  // Predicated region
  $region10: #{_positional_encoding_impl.1} parent=0 // pred_check
    _
  $region11: #{_positional_encoding_impl.1} parent=0 // pred_check_branch
    %21 = sbr.rel (0) target = $region13
  $region12: #{_positional_encoding_impl.1} parent=0 // pred_region
    _
  $region13: #{_positional_encoding_impl.1} parent=0 // pred_fallthru
    _
  // Predicated region
  $region14: #{_positional_encoding_impl.1} parent=0 // pred_check
    _
  $region15: #{_positional_encoding_impl.1} parent=0 // pred_check_branch
    %23 = sbr.rel (0) target = $region17
  $region16: #{_positional_encoding_impl.1} parent=0 // pred_region
    _
  $region17: #{_positional_encoding_impl.1} parent=0 // pred_fallthru
    _

</llo_original>
